<compile_context>
chip_gen: v5e
topology: v5e:2x2
jax: 0.10.0
libtpu: 0.0.40
codegen_flags: <defaults>
</compile_context>

<pallas_src>
import functools

import jax
import jax.numpy as jnp
from jax.experimental import pallas as pl
from jax.experimental.pallas import tpu as pltpu

_INV_SQRT2 = 0.7071067811865476  # 1/sqrt(2)


def _mlp_kernel(x_ref, w1_ref, b1_ref, w2_ref, b2_ref, o_ref):
    # x_ref:  (C_in,  TN)   spatial tile of one batch image, channels-first
    # w1_ref: (D_h,   C_in) fc1 weight (1x1 conv kernel squeezed)
    # b1_ref: (D_h,   1)
    # w2_ref: (C_out, D_h)  fc2 weight
    # b2_ref: (C_out, 1)
    # o_ref:  (C_out, TN)
    x = x_ref[...]

    # fc1: channel matmul on the MXU, f32 accumulation; bias broadcast over lanes.
    h = jnp.dot(w1_ref[...], x, preferred_element_type=jnp.float32) + b1_ref[...]

    # Exact GELU (matches torch.nn.GELU() default): 0.5*x*(1+erf(x/sqrt(2))).
    # erf goes to the EUP slot; VPU handles the cheap mul/adds.
    a = h * 0.5 * (1.0 + jax.lax.erf(h * _INV_SQRT2))

    # fc2.
    o = jnp.dot(w2_ref[...], a.astype(w2_ref.dtype),
                preferred_element_type=jnp.float32) + b2_ref[...]

    o_ref[...] = o.astype(o_ref.dtype)


def _pick_spatial_tile(n):
    """Largest lane-dense tile (multiple of 128) that divides H*W, else full N."""
    for cand in (1024, 512, 256, 128):
        if n % cand == 0:
            return cand
    return n


@functools.partial(jax.jit, static_argnames=())
def mlp_forward(x, fc1_w, fc1_b, fc2_w, fc2_b):
    """x: (B, C_in, H, W).  fc1_w: (D_h, C_in, 1, 1).  fc2_w: (C_out, D_h, 1, 1).

    Returns (B, C_out, H, W), matching Mlp.forward (drop=0)."""
    B, C_in, H, W = x.shape
    D_h = fc1_w.shape[0]
    C_out = fc2_w.shape[0]
    N = H * W

    TN = _pick_spatial_tile(N)
    assert N % TN == 0
    grid = (B, N // TN)

    # Free reshapes only -- no extra HBM traffic in the wrapper.
    x2 = x.reshape(B, C_in, N)
    w1 = fc1_w.reshape(D_h, C_in)
    b1 = fc1_b.reshape(D_h, 1)
    w2 = fc2_w.reshape(C_out, D_h)
    b2 = fc2_b.reshape(C_out, 1)

    out = pl.pallas_call(
        _mlp_kernel,
        out_shape=jax.ShapeDtypeStruct((B, C_out, N), x.dtype),
        grid_spec=pltpu.PrefetchScalarGridSpec(
            num_scalar_prefetch=0,
            grid=grid,
            in_specs=[
                # X: one batch image, one lane-dense spatial tile per step.
                pl.BlockSpec((None, C_in, TN), lambda b, j: (b, 0, j)),
                # Weights / biases: same block every step -> VMEM-resident.
                pl.BlockSpec((D_h, C_in), lambda b, j: (0, 0)),
                pl.BlockSpec((D_h, 1), lambda b, j: (0, 0)),
                pl.BlockSpec((C_out, D_h), lambda b, j: (0, 0)),
                pl.BlockSpec((C_out, 1), lambda b, j: (0, 0)),
            ],
            out_specs=pl.BlockSpec((None, C_out, TN), lambda b, j: (b, 0, j)),
        ),
        compiler_params=pltpu.CompilerParams(
            # Every (batch, spatial-tile) block is independent -> fully parallel.
            dimension_semantics=("parallel", "parallel")),
    )(x2, w1, b1, w2, b2)

    return out.reshape(B, C_out, H, W)


def _reference(x, fc1_w, fc1_b, fc2_w, fc2_b):
    """Pure-JAX reference mirroring the PyTorch Mlp module (drop=0)."""
    w1 = fc1_w.reshape(fc1_w.shape[0], -1)
    w2 = fc2_w.reshape(fc2_w.shape[0], -1)
    h = jnp.einsum("oi,bihw->bohw", w1, x) + fc1_b[None, :, None, None]
    a = jax.nn.gelu(h, approximate=False)      # exact GELU == torch.nn.GELU()
    o = jnp.einsum("oi,bihw->bohw", w2, a) + fc2_b[None, :, None, None]
    return o


if __name__ == "__main__":
    # Small, module-consistent shapes:
    #   in_features=4, hidden_features=32, out_features defaults to in_features.
    B, C_in, H, W = 2, 4, 16, 16
    D_h = 32
    C_out = C_in

    key = jax.random.PRNGKey(0)
    kx, kw1, kb1, kw2, kb2 = jax.random.split(key, 5)

    x = jax.random.normal(kx, (B, C_in, H, W), dtype=jnp.float32)
    # Conv2d(kernel_size=1) parameter shapes: (out_ch, in_ch, 1, 1) and (out_ch,)
    fc1_w = 0.1 * jax.random.normal(kw1, (D_h, C_in, 1, 1), dtype=jnp.float32)
    fc1_b = 0.02 * jax.random.normal(kb1, (D_h,), dtype=jnp.float32)
    fc2_w = 0.1 * jax.random.normal(kw2, (C_out, D_h, 1, 1), dtype=jnp.float32)
    fc2_b = 0.02 * jax.random.normal(kb2, (C_out,), dtype=jnp.float32)

    out = mlp_forward(x, fc1_w, fc1_b, fc2_w, fc2_b)
    out = jax.block_until_ready(out)

    ref = _reference(x, fc1_w, fc1_b, fc2_w, fc2_b)
    assert out.shape == (B, C_out, H, W)
    assert jnp.allclose(out, ref, atol=1e-5, rtol=1e-5), float(
        jnp.max(jnp.abs(out - ref)))

    print("KERNEL_OK")
</pallas_src>

<mosaic_0001>
module attributes {stable_mosaic.version = 11 : i64} {
  func.func @_mlp_kernel(%arg0: i32, %arg1: i32, %arg2: memref<1x4x256xf32, #tpu.memory_space<vmem>>, %arg3: memref<32x4xf32, #tpu.memory_space<vmem>>, %arg4: memref<32x1xf32, #tpu.memory_space<vmem>>, %arg5: memref<4x32xf32, #tpu.memory_space<vmem>>, %arg6: memref<4x1xf32, #tpu.memory_space<vmem>>, %arg7: memref<1x4x256xf32, #tpu.memory_space<vmem>>) attributes {dimension_semantics = [#tpu.dimension_semantics<parallel>, #tpu.dimension_semantics<parallel>], iteration_bounds = array<i64: 2, 1>, scalar_prefetch = 0 : i64, scratch_operands = 0 : i64, tpu.core_type = #tpu.core_type<tc>, window_params = [{transform_indices = @transform_0, window_bounds = array<i64: 1, 4, 256>}, {pipeline_mode = #tpu.pipeline_mode<synchronous>, transform_indices = @transform_1, window_bounds = array<i64: 32, 4>}, {pipeline_mode = #tpu.pipeline_mode<synchronous>, transform_indices = @transform_2, window_bounds = array<i64: 32, 1>}, {pipeline_mode = #tpu.pipeline_mode<synchronous>, transform_indices = @transform_3, window_bounds = array<i64: 4, 32>}, {pipeline_mode = #tpu.pipeline_mode<synchronous>, transform_indices = @transform_4, window_bounds = array<i64: 4, 1>}, {transform_indices = @transform_5, window_bounds = array<i64: 1, 4, 256>}]} {
    %c0 = arith.constant 0 : index
    %c0_0 = arith.constant 0 : index
    %c0_1 = arith.constant 0 : index
    %0 = vector.load %arg2[%c0, %c0_0, %c0_1] : memref<1x4x256xf32, #tpu.memory_space<vmem>>, vector<1x4x256xf32>
    %1 = vector.shape_cast %0 : vector<1x4x256xf32> to vector<4x256xf32>
    %c0_2 = arith.constant 0 : index
    %c0_3 = arith.constant 0 : index
    %2 = vector.load %arg3[%c0_2, %c0_3] : memref<32x4xf32, #tpu.memory_space<vmem>>, vector<32x4xf32>
    %cst = arith.constant dense<0.000000e+00> : vector<32x256xf32>
    %3 = tpu.matmul %2, %1, %cst {dimension_numbers = #tpu.dot_dimension_numbers<[1], [0], [0], [1], [0, 0, 1, 1], [], []>} : vector<32x4xf32>, vector<4x256xf32>, vector<32x256xf32> -> vector<32x256xf32>
    %c0_4 = arith.constant 0 : index
    %c0_5 = arith.constant 0 : index
    %4 = vector.load %arg4[%c0_4, %c0_5] : memref<32x1xf32, #tpu.memory_space<vmem>>, vector<32x1xf32>
    %5 = vector.broadcast %4 : vector<32x1xf32> to vector<32x256xf32>
    %6 = arith.addf %3, %5 : vector<32x256xf32>
    %cst_6 = arith.constant 5.000000e-01 : f32
    %7 = vector.broadcast %cst_6 : f32 to vector<32x256xf32>
    %8 = arith.mulf %6, %7 : vector<32x256xf32>
    %cst_7 = arith.constant 0.707106769 : f32
    %9 = vector.broadcast %cst_7 : f32 to vector<32x256xf32>
    %10 = arith.mulf %6, %9 : vector<32x256xf32>
    %11 = math.erf %10 : vector<32x256xf32>
    %cst_8 = arith.constant 1.000000e+00 : f32
    %12 = vector.broadcast %cst_8 : f32 to vector<32x256xf32>
    %13 = arith.addf %12, %11 : vector<32x256xf32>
    %14 = arith.mulf %8, %13 : vector<32x256xf32>
    %c0_9 = arith.constant 0 : index
    %c0_10 = arith.constant 0 : index
    %15 = vector.load %arg5[%c0_9, %c0_10] : memref<4x32xf32, #tpu.memory_space<vmem>>, vector<4x32xf32>
    %cst_11 = arith.constant dense<0.000000e+00> : vector<4x256xf32>
    %16 = tpu.matmul %15, %14, %cst_11 {dimension_numbers = #tpu.dot_dimension_numbers<[1], [0], [0], [1], [0, 0, 1, 1], [], []>} : vector<4x32xf32>, vector<32x256xf32>, vector<4x256xf32> -> vector<4x256xf32>
    %c0_12 = arith.constant 0 : index
    %c0_13 = arith.constant 0 : index
    %17 = vector.load %arg6[%c0_12, %c0_13] : memref<4x1xf32, #tpu.memory_space<vmem>>, vector<4x1xf32>
    %18 = vector.broadcast %17 : vector<4x1xf32> to vector<4x256xf32>
    %19 = arith.addf %16, %18 : vector<4x256xf32>
    %c0_14 = arith.constant 0 : index
    %c0_15 = arith.constant 0 : index
    %c0_16 = arith.constant 0 : index
    %20 = vector.load %arg7[%c0_14, %c0_15, %c0_16] : memref<1x4x256xf32, #tpu.memory_space<vmem>>, vector<1x4x256xf32>
    %21 = vector.shape_cast %20 : vector<1x4x256xf32> to vector<4x256xf32>
    %22 = vector.shape_cast %19 : vector<4x256xf32> to vector<1x4x256xf32>
    tpu.vector_store %arg7[%c0_14, %c0_15, %c0_16], %22 {strides = array<i32>} : memref<1x4x256xf32, #tpu.memory_space<vmem>>, vector<1x4x256xf32>,
    return
  }
  func.func @transform_0(%arg0: i32, %arg1: i32) -> (i32, i32, i32) {
    %c0_i32 = arith.constant 0 : i32
    %c0_i32_0 = arith.constant 0 : i32
    return %arg0, %c0_i32, %arg1 : i32, i32, i32
  }
  func.func @transform_1(%arg0: i32, %arg1: i32) -> (i32, i32) {
    %c0_i32 = arith.constant 0 : i32
    %c0_i32_0 = arith.constant 0 : i32
    %c0_i32_1 = arith.constant 0 : i32
    return %c0_i32, %c0_i32_0 : i32, i32
  }
  func.func @transform_2(%arg0: i32, %arg1: i32) -> (i32, i32) {
    %c0_i32 = arith.constant 0 : i32
    %c0_i32_0 = arith.constant 0 : i32
    %c0_i32_1 = arith.constant 0 : i32
    return %c0_i32, %c0_i32_0 : i32, i32
  }
  func.func @transform_3(%arg0: i32, %arg1: i32) -> (i32, i32) {
    %c0_i32 = arith.constant 0 : i32
    %c0_i32_0 = arith.constant 0 : i32
    %c0_i32_1 = arith.constant 0 : i32
    return %c0_i32, %c0_i32_0 : i32, i32
  }
  func.func @transform_4(%arg0: i32, %arg1: i32) -> (i32, i32) {
    %c0_i32 = arith.constant 0 : i32
    %c0_i32_0 = arith.constant 0 : i32
    %c0_i32_1 = arith.constant 0 : i32
    return %c0_i32, %c0_i32_0 : i32, i32
  }
  func.func @transform_5(%arg0: i32, %arg1: i32) -> (i32, i32, i32) {
    %c0_i32 = arith.constant 0 : i32
    %c0_i32_0 = arith.constant 0 : i32
    return %arg0, %c0_i32, %arg1 : i32, i32, i32
  }
}

</mosaic_0001>

<llo_original>
// kernel: mlp_forward.1
$region0: #{mlp_forward.1}
  #allocation0 [shape = 'u32[]', space=smem, size = 0x4, offset = 0x4, fixed_abs, tag = 'smem constant byte address 0x4 - core index']
  #allocation1 [shape = 'u32[72,128]{1,0:T(1,128)}', space=vmem, size = 0x9000, scoped, tag = 'internal scratch']
  %s0 = inlined_call_operand.vmem [shape: f32[2,4,256], index: 0, kind: input, shape index: {}]
  %s1 = inlined_call_operand.vmem [shape: f32[32,4], index: 1, kind: input, shape index: {}]
  %s2 = inlined_call_operand.vmem [shape: f32[32,1], index: 2, kind: input, shape index: {}]
  %s3 = inlined_call_operand.vmem [shape: f32[4,32], index: 3, kind: input, shape index: {}]
  %s4 = inlined_call_operand.vmem [shape: f32[4,1], index: 4, kind: input, shape index: {}]
  %s5 = inlined_call_operand.vmem [shape: f32[2,4,256], index: 5, kind: output, shape index: {}]
  %s6 = sld [smem:[#allocation0]]
  $region53: #{mlp_forward.1} parent=0
    _
  %s8 = ssub.s32 1, %s6
  %s9 = scalar_select 0, %s8, %s6
  loop: start=0, step=1, limit=4
  $region2: #{mlp_forward.1} parent=0 // loop_pre_header
    _
  $region3: #{mlp_forward.1} parent=0 // loop_header
    %s11 = sphi 0, %s15
    %p12 = scmp.ge.s32.totalorder %s11, 4
    %s18 = sphi 0, %s30
    %s19 = sphi 0, %s26
    %s20 = sphi 0, %s18
    %s21 = sphi 0, %s19
    %s22 = sphi 0, %s20
    %s23 = sphi 0, %s21
    %s35 = sphi 0, %s37
    %s38 = sphi 0, %s35
    %s39 = sphi 0, %s38
    %s55 = sphi 0, %s39
    %s59 = sphi 0, %s59
    %s61 = sphi 0, %s59
    %s62 = sphi 0, %s61
    %s76 = sphi 0, %s62
    %s80 = sphi 0, %s80
    %s82 = sphi 0, %s80
    %s83 = sphi 0, %s82
    %s97 = sphi 0, %s83
    %s101 = sphi 0, %s101
    %s103 = sphi 0, %s101
    %s104 = sphi 0, %s103
    %s118 = sphi 0, %s104
    %s122 = sphi 0, %s122
    %s124 = sphi 0, %s122
    %s125 = sphi 0, %s124
    %s139 = sphi 0, %s125
    %s147 = sphi 0, %s149
    %s150 = sphi 0, %s147
    %s151 = sphi 0, %s150
    %s167 = sphi 0, %s151
  $region4: #{mlp_forward.1} parent=0 // loop_header_branch
    %14 = sbr.rel (%p12) target = $region8
  $region5: #{mlp_forward.1} parent=0 // loop_body
    %s16 = ssub.s32 %s11, 1
    %s17 = ssub.s32 %s11, 2
    %s24 = sadd.s32 1, %s19
    %p25 = scmp.ge.s32.totalorder %s24, 1
    %s26 = scalar_select %p25, 0, %s24
    %s27 = sadd.s32 1, %s18
    %s28 = scalar_select %p25, %s27, %s18
    %p29 = scmp.ge.s32.totalorder %s28, 2
    %s30 = scalar_select %p29, 0, %s28
    %s31 = ssub.s32 %s18, %s30
    %s32 = ssub.s32 %s19, %s26
    %s33 = sor.u32 %s31, %s32
    %p34 = scmp.eq.s32.totalorder %s33, 0
    %s36 = sadd.s32 %s35, 1
    %s37 = scalar_select %p34, %s35, %s36
    %p40 = pneg %p34
    %p41 = scmp.eq.s32.totalorder %s11, 1
    %p42 = por %p40, %p41
    %p43 = scmp.ne.s32.totalorder %s35, %s38
    %p44 = scmp.eq.s32.totalorder %s11, 0
    %p45 = por %p43, %p44
    %p46 = scmp.ne.s32.totalorder %s35, %s38
    %p47 = scmp.eq.s32.totalorder %s16, 1
    %p48 = por %p46, %p47
    %p49 = scmp.ne.s32.totalorder %s38, %s39
    %p50 = scmp.eq.s32.totalorder %s16, 0
    %p51 = por %p49, %p50
    %p52 = scmp.ne.s32.totalorder %s38, %s39
    %p53 = scmp.eq.s32.totalorder %s17, 1
    %p54 = por %p52, %p53
    %p56 = scmp.ne.s32.totalorder %s39, %s55
    %p57 = scmp.eq.s32.totalorder %s17, 0
    %p58 = por %p56, %p57
    %s60 = sadd.s32 %s59, 1
    %p63 = scmp.eq.s32.totalorder %s11, 1
    %p64 = scmp.ne.s32.totalorder %s59, %s61
    %p65 = scmp.eq.s32.totalorder %s11, 0
    %p66 = por %p64, %p65
    %p67 = scmp.ne.s32.totalorder %s59, %s61
    %p68 = scmp.eq.s32.totalorder %s16, 1
    %p69 = por %p67, %p68
    %p70 = scmp.ne.s32.totalorder %s61, %s62
    %p71 = scmp.eq.s32.totalorder %s16, 0
    %p72 = por %p70, %p71
    %p73 = scmp.ne.s32.totalorder %s61, %s62
    %p74 = scmp.eq.s32.totalorder %s17, 1
    %p75 = por %p73, %p74
    %p77 = scmp.ne.s32.totalorder %s62, %s76
    %p78 = scmp.eq.s32.totalorder %s17, 0
    %p79 = por %p77, %p78
    %s81 = sadd.s32 %s80, 1
    %p84 = scmp.eq.s32.totalorder %s11, 1
    %p85 = scmp.ne.s32.totalorder %s80, %s82
    %p86 = scmp.eq.s32.totalorder %s11, 0
    %p87 = por %p85, %p86
    %p88 = scmp.ne.s32.totalorder %s80, %s82
    %p89 = scmp.eq.s32.totalorder %s16, 1
    %p90 = por %p88, %p89
    %p91 = scmp.ne.s32.totalorder %s82, %s83
    %p92 = scmp.eq.s32.totalorder %s16, 0
    %p93 = por %p91, %p92
    %p94 = scmp.ne.s32.totalorder %s82, %s83
    %p95 = scmp.eq.s32.totalorder %s17, 1
    %p96 = por %p94, %p95
    %p98 = scmp.ne.s32.totalorder %s83, %s97
    %p99 = scmp.eq.s32.totalorder %s17, 0
    %p100 = por %p98, %p99
    %s102 = sadd.s32 %s101, 1
    %p105 = scmp.eq.s32.totalorder %s11, 1
    %p106 = scmp.ne.s32.totalorder %s101, %s103
    %p107 = scmp.eq.s32.totalorder %s11, 0
    %p108 = por %p106, %p107
    %p109 = scmp.ne.s32.totalorder %s101, %s103
    %p110 = scmp.eq.s32.totalorder %s16, 1
    %p111 = por %p109, %p110
    %p112 = scmp.ne.s32.totalorder %s103, %s104
    %p113 = scmp.eq.s32.totalorder %s16, 0
    %p114 = por %p112, %p113
    %p115 = scmp.ne.s32.totalorder %s103, %s104
    %p116 = scmp.eq.s32.totalorder %s17, 1
    %p117 = por %p115, %p116
    %p119 = scmp.ne.s32.totalorder %s104, %s118
    %p120 = scmp.eq.s32.totalorder %s17, 0
    %p121 = por %p119, %p120
    %s123 = sadd.s32 %s122, 1
    %p126 = scmp.eq.s32.totalorder %s11, 1
    %p127 = scmp.ne.s32.totalorder %s122, %s124
    %p128 = scmp.eq.s32.totalorder %s11, 0
    %p129 = por %p127, %p128
    %p130 = scmp.ne.s32.totalorder %s122, %s124
    %p131 = scmp.eq.s32.totalorder %s16, 1
    %p132 = por %p130, %p131
    %p133 = scmp.ne.s32.totalorder %s124, %s125
    %p134 = scmp.eq.s32.totalorder %s16, 0
    %p135 = por %p133, %p134
    %p136 = scmp.ne.s32.totalorder %s124, %s125
    %p137 = scmp.eq.s32.totalorder %s17, 1
    %p138 = por %p136, %p137
    %p140 = scmp.ne.s32.totalorder %s125, %s139
    %p141 = scmp.eq.s32.totalorder %s17, 0
    %p142 = por %p140, %p141
    %s143 = ssub.s32 %s18, %s30
    %s144 = ssub.s32 %s19, %s26
    %s145 = sor.u32 %s143, %s144
    %p146 = scmp.eq.s32.totalorder %s145, 0
    %s148 = sadd.s32 %s147, 1
    %s149 = scalar_select %p146, %s147, %s148
    %p152 = pneg %p146
    %p153 = scmp.eq.s32.totalorder %s11, 1
    %p154 = por %p152, %p153
    %p155 = scmp.ne.s32.totalorder %s147, %s150
    %p156 = scmp.eq.s32.totalorder %s11, 0
    %p157 = por %p155, %p156
    %p158 = scmp.ne.s32.totalorder %s147, %s150
    %p159 = scmp.eq.s32.totalorder %s16, 1
    %p160 = por %p158, %p159
    %p161 = scmp.ne.s32.totalorder %s150, %s151
    %p162 = scmp.eq.s32.totalorder %s16, 0
    %p163 = por %p161, %p162
    %p164 = scmp.ne.s32.totalorder %s150, %s151
    %p165 = scmp.eq.s32.totalorder %s17, 1
    %p166 = por %p164, %p165
    %p168 = scmp.ne.s32.totalorder %s151, %s167
    %p169 = scmp.eq.s32.totalorder %s17, 0
    %p170 = por %p168, %p169
    %p171 = scmp.le.s32.totalorder 1, %s11
    %p172 = scmp.lt.s32.totalorder %s11, 3
    %p173 = pnand %p171, %p172
    %p174 = pneg %p173
    // Predicated region
    $region9: #{mlp_forward.1} parent=5 // pred_check
      _
    $region10: #{mlp_forward.1} parent=5 // pred_check_branch
      %176 = sbr.rel (%p173) target = $region12
    $region11: #{mlp_forward.1} parent=5 // pred_region
      %s177 = ssub.s32 %s11, 1
      // Predicated region
      $region13: #{mlp_forward.1} parent=11 // pred_check
        %p178 = pneg %p72
      $region14: #{mlp_forward.1} parent=11 // pred_check_branch
        %180 = sbr.rel (%p178) target = $region16
      $region15: #{mlp_forward.1} parent=11 // pred_region
        _
      $region16: #{mlp_forward.1} parent=11 // pred_fallthru
        _
      // Predicated region
      $region17: #{mlp_forward.1} parent=11 // pred_check
        %p181 = pneg %p93
      $region18: #{mlp_forward.1} parent=11 // pred_check_branch
        %183 = sbr.rel (%p181) target = $region20
      $region19: #{mlp_forward.1} parent=11 // pred_region
        _
      $region20: #{mlp_forward.1} parent=11 // pred_fallthru
        _
      // Predicated region
      $region21: #{mlp_forward.1} parent=11 // pred_check
        %p184 = pneg %p114
      $region22: #{mlp_forward.1} parent=11 // pred_check_branch
        %186 = sbr.rel (%p184) target = $region24
      $region23: #{mlp_forward.1} parent=11 // pred_region
        _
      $region24: #{mlp_forward.1} parent=11 // pred_fallthru
        _
      // Predicated region
      $region25: #{mlp_forward.1} parent=11 // pred_check
        %p187 = pneg %p135
      $region26: #{mlp_forward.1} parent=11 // pred_check_branch
        %189 = sbr.rel (%p187) target = $region28
      $region27: #{mlp_forward.1} parent=11 // pred_region
        _
      $region28: #{mlp_forward.1} parent=11 // pred_fallthru
        _
    $region12: #{mlp_forward.1} parent=5 // pred_fallthru
      _
    %p190 = scmp.lt.s32.totalorder %s11, 2
    // Predicated region
    $region29: #{mlp_forward.1} parent=5 // pred_check
      %p191 = pneg %p190
    $region30: #{mlp_forward.1} parent=5 // pred_check_branch
      %193 = sbr.rel (%p191) target = $region32
    $region31: #{mlp_forward.1} parent=5 // pred_region
      // Predicated region
      $region33: #{mlp_forward.1} parent=31 // pred_check
        %p194 = pneg %p45
      $region34: #{mlp_forward.1} parent=31 // pred_check_branch
        %196 = sbr.rel (%p194) target = $region36
      $region35: #{mlp_forward.1} parent=31 // pred_region
        %s197 = smul.u32 2, %s19
        %p198 = scmp.lt.s32.totalorder %s18, 1
        %s199 = scalar_select %p198, %s18, 1
        %p200 = scmp.lt.s32.totalorder %s197, 1
        %s201 = scalar_select %p200, %s197, 1
        %s202 = smul.addr %s199, 2
        %s203 = sadd.s32 %s201, %s202
        %s204 = smul.addr %s203, 4
        %s205 = scalar_lea.vmem %s0, %s204
        %s206 = smul.u32 2, %s19
      $region36: #{mlp_forward.1} parent=31 // pred_fallthru
        _
    $region32: #{mlp_forward.1} parent=5 // pred_fallthru
      _
    %p207 = scmp.le.s32.totalorder 1, %s11
    %p208 = scmp.lt.s32.totalorder %s11, 3
    %p209 = pnand %p207, %p208
    %p210 = pneg %p209
    // Predicated region
    $region37: #{mlp_forward.1} parent=5 // pred_check
      _
    $region38: #{mlp_forward.1} parent=5 // pred_check_branch
      %212 = sbr.rel (%p209) target = $region40
    $region39: #{mlp_forward.1} parent=5 // pred_region
      %s213 = ssub.s32 %s11, 1
      %s214 = smul.u32 2, %s21
      %p215 = scmp.lt.s32.totalorder %s20, 1
      %s216 = scalar_select %p215, %s20, 1
      %p217 = scmp.lt.s32.totalorder %s214, 1
      %s218 = scalar_select %p217, %s214, 1
      %s219 = smul.addr %s216, 2
      %s220 = sadd.s32 %s218, %s219
      %s221 = smul.addr %s220, 4
      %s222 = scalar_lea.vmem %s0, %s221
      %p223 = pneg %p51
      %p224 = pneg %p48
      %p225 = pneg %p72
      %p226 = pneg %p69
      %p227 = pneg %p93
      %p228 = pneg %p90
      %p229 = pneg %p114
      %p230 = pneg %p111
      %p231 = pneg %p135
      %p232 = pneg %p132
      %p233 = pneg %p163
      %p234 = pneg %p160
      %s235 = smul.u32 2, %s21
      %p236 = scmp.lt.s32.totalorder %s20, 1
      %s237 = scalar_select %p236, %s20, 1
      %p238 = scmp.lt.s32.totalorder %s235, 1
      %s239 = scalar_select %p238, %s235, 1
      %s240 = smul.addr %s237, 2
      %s241 = sadd.s32 %s239, %s240
      %s242 = smul.addr %s241, 4
      %s243 = scalar_lea.vmem %s5, %s242
      %s244 = smul.u32 2, %s21
      %p245 = scmp.lt.s32.totalorder %s20, 1
      %s246 = scalar_select %p245, %s20, 1
      %p247 = scmp.lt.s32.totalorder %s244, 1
      %s248 = scalar_select %p247, %s244, 1
      %s249 = smul.addr %s246, 2
      %s250 = sadd.s32 %s248, %s249
      %s251 = smul.addr %s250, 4
      %s252 = scalar_lea.vmem %s0, %s251
      %s253 = smul.u32 2, %s21
      %s254 = smul.u32 2, %s21
      %p255 = scmp.lt.s32.totalorder %s20, 1
      %s256 = scalar_select %p255, %s20, 1
      %p257 = scmp.lt.s32.totalorder %s254, 1
      %s258 = scalar_select %p257, %s254, 1
      %s259 = smul.addr %s256, 2
      %s260 = sadd.s32 %s258, %s259
      %s261 = smul.addr %s260, 4
      %s262 = scalar_lea.vmem %s5, %s261
      %s263 = smul.u32 2, %s21
      %v264 = vld [vmem:[%s252] sm:$0xff]
      %v265 = vld [vmem:[%s1] sm:$0xff]
      %v266 = vld [vmem:[%s1 + $0x8] sm:$0xff]
      %v267 = vld [vmem:[%s1 + $0x10] sm:$0xff]
      %v268 = vld [vmem:[%s1 + $0x18] sm:$0xff]
      %v269 = vld [vmem:[%s2] sm:$0xff]
      %v270 = vld [vmem:[%s2 + $0x8] sm:$0xff]
      %v271 = vld [vmem:[%s2 + $0x10] sm:$0xff]
      %v272 = vld [vmem:[%s2 + $0x18] sm:$0xff]
      %274 = vset.pattern.permute.xlu0 0
      %275 = vperm.xlu0 %274, %v269
      %v276 = vpop.permute.xlu0 %275
      %279 = vset.pattern.permute.xlu0 0
      %280 = vperm.xlu0 %279, %v270
      %v281 = vpop.permute.xlu0 %280
      %284 = vset.pattern.permute.xlu0 0
      %285 = vperm.xlu0 %284, %v271
      %v286 = vpop.permute.xlu0 %285
      %289 = vset.pattern.permute.xlu0 0
      %290 = vperm.xlu0 %289, %v272
      %v291 = vpop.permute.xlu0 %290
      %294 = vst [vmem:[#allocation1] ss:$2 sm:$0xff] %v264
      %v295 = vld.sshfl [vmem:[#allocation1] sm:$0xff pattern:$0x75316420]
      %v296 = vld.sshfl [vmem:[#allocation1 + $0x8] sm:$0xff pattern:$0x75316420]
      %vm297 = vcmask 31744
      %v299 = vsel %vm297, %v265, 0
      %v302 = vsel %vm297, %v266, 0
      %v305 = vsel %vm297, %v267, 0
      %v308 = vsel %vm297, %v268, 0
      %vm310 = vcmask 1043456
      %v311 = vsel %vm310, %v295, 0
      %v313 = vsel %vm310, %v296, 0
      %315 = vmatpush.msra.mxu0 0.0
      %316 = vmatpush.msra.mxu0 0.0
      %317 = vmatpush.msra.mxu0 0.0
      %318 = vmatpush.msra.mxu0 0.0
      %319 = vmatpush.msra.mxu0 0.0
      %320 = vmatpush.msra.mxu0 0.0
      %321 = vmatpush.msra.mxu0 0.0
      %322 = vmatpush.msra.mxu0 0.0
      %323 = vmatpush.msra.mxu0 0.0
      %324 = vmatpush.msra.mxu0 0.0
      %325 = vmatpush.msra.mxu0 0.0
      %326 = vmatpush.msra.mxu0 0.0
      %327 = vmatpush.msra.mxu0 0.0
      %328 = vmatpush.msra.mxu0 0.0
      %329 = vmatpush.msra.mxu0 0.0
      %330 = vmatpush.msra.mxu0 %v311
      %331 = vmatmul.f32.gmra.mxu0 %v299
      %v332 = vpop.f32.mrf.mxu0
      %v333 = vadd.f32 %v276, %v332
      %334 = vmatmul.f32.gmra.mxu0 %v302
      %v335 = vpop.f32.mrf.mxu0
      %v336 = vadd.f32 %v281, %v335
      %337 = vmatmul.f32.gmra.mxu0 %v305
      %v338 = vpop.f32.mrf.mxu0
      %v339 = vadd.f32 %v286, %v338
      %340 = vmatmul.f32.gmra.mxu0 %v308
      %v341 = vpop.f32.mrf.mxu0
      %v342 = vadd.f32 %v291, %v341
      %343 = vdwg.mxu0
      %344 = vmatpush.msra.mxu0 0.0
      %345 = vmatpush.msra.mxu0 0.0
      %346 = vmatpush.msra.mxu0 0.0
      %347 = vmatpush.msra.mxu0 0.0
      %348 = vmatpush.msra.mxu0 0.0
      %349 = vmatpush.msra.mxu0 0.0
      %350 = vmatpush.msra.mxu0 0.0
      %351 = vmatpush.msra.mxu0 0.0
      %352 = vmatpush.msra.mxu0 0.0
      %353 = vmatpush.msra.mxu0 0.0
      %354 = vmatpush.msra.mxu0 0.0
      %355 = vmatpush.msra.mxu0 0.0
      %356 = vmatpush.msra.mxu0 0.0
      %357 = vmatpush.msra.mxu0 0.0
      %358 = vmatpush.msra.mxu0 0.0
      %359 = vmatpush.msra.mxu0 %v313
      %360 = vmatmul.f32.gmra.mxu0 %v299
      %v361 = vpop.f32.mrf.mxu0
      %v362 = vadd.f32 %v276, %v361
      %363 = vmatmul.f32.gmra.mxu0 %v302
      %v364 = vpop.f32.mrf.mxu0
      %v365 = vadd.f32 %v281, %v364
      %366 = vmatmul.f32.gmra.mxu0 %v305
      %v367 = vpop.f32.mrf.mxu0
      %v368 = vadd.f32 %v286, %v367
      %369 = vmatmul.f32.gmra.mxu0 %v308
      %v370 = vpop.f32.mrf.mxu0
      %v371 = vadd.f32 %v291, %v370
      %372 = vdwg.mxu0
      %v373 = vmul.f32 %v333, 0.5
      %v374 = vmul.f32 %v362, 0.5
      %v375 = vmul.f32 %v336, 0.5
      %v376 = vmul.f32 %v365, 0.5
      %v377 = vmul.f32 %v339, 0.5
      %v378 = vmul.f32 %v368, 0.5
      %v379 = vmul.f32 %v342, 0.5
      %v380 = vmul.f32 %v371, 0.5
      %v381 = vmul.f32 %v333, 0.70710677
      %v382 = vmul.f32 %v362, 0.70710677
      %v383 = vmul.f32 %v336, 0.70710677
      %v384 = vmul.f32 %v365, 0.70710677
      %v385 = vmul.f32 %v339, 0.70710677
      %v386 = vmul.f32 %v368, 0.70710677
      %v387 = vmul.f32 %v342, 0.70710677
      %v388 = vmul.f32 %v371, 0.70710677
      %v389 = vmul.f32 %v381, %v381
      %v390 = vmin.f32 16.0, %v389
      %v391 = vmul.f32 %v390, 2.1237322e-06
      %v392 = vadd.f32 %v391, 0.00028619796
      %v393 = vmul.f32 %v390, %v392
      %v394 = vadd.f32 %v393, 0.0036580483
      %v395 = vmul.f32 %v390, %v394
      %v396 = vadd.f32 %v395, 0.05243302
      %v397 = vmul.f32 %v390, %v396
      %v398 = vadd.f32 %v397, 0.18741608
      %v399 = vmul.f32 %v390, %v398
      %v400 = vadd.f32 %v399, 1.1283791
      %v401 = vmul.f32 %v381, %v400
      %v402 = vmul.f32 %v390, 3.8918573e-05
      %v403 = vadd.f32 %v402, 0.001143296
      %v404 = vmul.f32 %v390, %v403
      %v405 = vadd.f32 %v404, 0.014752088
      %v406 = vmul.f32 %v390, %v405
      %v407 = vadd.f32 %v406, 0.112945676
      %v408 = vmul.f32 %v390, %v407
      %v409 = vadd.f32 %v408, 0.4994258
      %v410 = vmul.f32 %v390, %v409
      %v411 = vadd.f32 %v410, 1.0
      %v412 = vrcp.pop %v411
      %v413 = vmul.f32 %v411, %v412
      %v414 = vsub.f32 1.0, %v413
      %v415 = vmul.f32 %v412, %v414
      %v416 = vadd.f32 %v412, %v415
      %vm417 = vweird.f32 %v411
      %vm418 = vweird.f32 %v412
      %vm419 = vmor %vm417, %vm418
      %v420 = vsel %vm419, %v412, %v416
      %v421 = vand.u32 2147483647, %v411
      %vm422 = vcmp.eq.f32.partialorder %v421, 8.507059e+37
      %v423 = vand.u32 %v411, 2147483648
      %v424 = vor.u32 1.1754944e-38, %v423
      %v425 = vsel %vm422, %v424, %v420
      %v426 = vmul.f32 %v401, %v425
      %v427 = vmin.f32 %v426, 1.0
      %v428 = vmax.f32 %v427, -1.0
      %v429 = vmul.f32 %v382, %v382
      %v430 = vmin.f32 16.0, %v429
      %v431 = vmul.f32 %v430, 2.1237322e-06
      %v432 = vadd.f32 %v431, 0.00028619796
      %v433 = vmul.f32 %v430, %v432
      %v434 = vadd.f32 %v433, 0.0036580483
      %v435 = vmul.f32 %v430, %v434
      %v436 = vadd.f32 %v435, 0.05243302
      %v437 = vmul.f32 %v430, %v436
      %v438 = vadd.f32 %v437, 0.18741608
      %v439 = vmul.f32 %v430, %v438
      %v440 = vadd.f32 %v439, 1.1283791
      %v441 = vmul.f32 %v382, %v440
      %v442 = vmul.f32 %v430, 3.8918573e-05
      %v443 = vadd.f32 %v442, 0.001143296
      %v444 = vmul.f32 %v430, %v443
      %v445 = vadd.f32 %v444, 0.014752088
      %v446 = vmul.f32 %v430, %v445
      %v447 = vadd.f32 %v446, 0.112945676
      %v448 = vmul.f32 %v430, %v447
      %v449 = vadd.f32 %v448, 0.4994258
      %v450 = vmul.f32 %v430, %v449
      %v451 = vadd.f32 %v450, 1.0
      %v452 = vrcp.pop %v451
      %v453 = vmul.f32 %v451, %v452
      %v454 = vsub.f32 1.0, %v453
      %v455 = vmul.f32 %v452, %v454
      %v456 = vadd.f32 %v452, %v455
      %vm457 = vweird.f32 %v451
      %vm458 = vweird.f32 %v452
      %vm459 = vmor %vm457, %vm458
      %v460 = vsel %vm459, %v452, %v456
      %v461 = vand.u32 2147483647, %v451
      %vm462 = vcmp.eq.f32.partialorder %v461, 8.507059e+37
      %v463 = vand.u32 %v451, 2147483648
      %v464 = vor.u32 1.1754944e-38, %v463
      %v465 = vsel %vm462, %v464, %v460
      %v466 = vmul.f32 %v441, %v465
      %v467 = vmin.f32 %v466, 1.0
      %v468 = vmax.f32 %v467, -1.0
      %v469 = vmul.f32 %v383, %v383
      %v470 = vmin.f32 16.0, %v469
      %v471 = vmul.f32 %v470, 2.1237322e-06
      %v472 = vadd.f32 %v471, 0.00028619796
      %v473 = vmul.f32 %v470, %v472
      %v474 = vadd.f32 %v473, 0.0036580483
      %v475 = vmul.f32 %v470, %v474
      %v476 = vadd.f32 %v475, 0.05243302
      %v477 = vmul.f32 %v470, %v476
      %v478 = vadd.f32 %v477, 0.18741608
      %v479 = vmul.f32 %v470, %v478
      %v480 = vadd.f32 %v479, 1.1283791
      %v481 = vmul.f32 %v383, %v480
      %v482 = vmul.f32 %v470, 3.8918573e-05
      %v483 = vadd.f32 %v482, 0.001143296
      %v484 = vmul.f32 %v470, %v483
      %v485 = vadd.f32 %v484, 0.014752088
      %v486 = vmul.f32 %v470, %v485
      %v487 = vadd.f32 %v486, 0.112945676
      %v488 = vmul.f32 %v470, %v487
      %v489 = vadd.f32 %v488, 0.4994258
      %v490 = vmul.f32 %v470, %v489
      %v491 = vadd.f32 %v490, 1.0
      %v492 = vrcp.pop %v491
      %v493 = vmul.f32 %v491, %v492
      %v494 = vsub.f32 1.0, %v493
      %v495 = vmul.f32 %v492, %v494
      %v496 = vadd.f32 %v492, %v495
      %vm497 = vweird.f32 %v491
      %vm498 = vweird.f32 %v492
      %vm499 = vmor %vm497, %vm498
      %v500 = vsel %vm499, %v492, %v496
      %v501 = vand.u32 2147483647, %v491
      %vm502 = vcmp.eq.f32.partialorder %v501, 8.507059e+37
      %v503 = vand.u32 %v491, 2147483648
      %v504 = vor.u32 1.1754944e-38, %v503
      %v505 = vsel %vm502, %v504, %v500
      %v506 = vmul.f32 %v481, %v505
      %v507 = vmin.f32 %v506, 1.0
      %v508 = vmax.f32 %v507, -1.0
      %v509 = vmul.f32 %v384, %v384
      %v510 = vmin.f32 16.0, %v509
      %v511 = vmul.f32 %v510, 2.1237322e-06
      %v512 = vadd.f32 %v511, 0.00028619796
      %v513 = vmul.f32 %v510, %v512
      %v514 = vadd.f32 %v513, 0.0036580483
      %v515 = vmul.f32 %v510, %v514
      %v516 = vadd.f32 %v515, 0.05243302
      %v517 = vmul.f32 %v510, %v516
      %v518 = vadd.f32 %v517, 0.18741608
      %v519 = vmul.f32 %v510, %v518
      %v520 = vadd.f32 %v519, 1.1283791
      %v521 = vmul.f32 %v384, %v520
      %v522 = vmul.f32 %v510, 3.8918573e-05
      %v523 = vadd.f32 %v522, 0.001143296
      %v524 = vmul.f32 %v510, %v523
      %v525 = vadd.f32 %v524, 0.014752088
      %v526 = vmul.f32 %v510, %v525
      %v527 = vadd.f32 %v526, 0.112945676
      %v528 = vmul.f32 %v510, %v527
      %v529 = vadd.f32 %v528, 0.4994258
      %v530 = vmul.f32 %v510, %v529
      %v531 = vadd.f32 %v530, 1.0
      %v532 = vrcp.pop %v531
      %v533 = vmul.f32 %v531, %v532
      %v534 = vsub.f32 1.0, %v533
      %v535 = vmul.f32 %v532, %v534
      %v536 = vadd.f32 %v532, %v535
      %vm537 = vweird.f32 %v531
      %vm538 = vweird.f32 %v532
      %vm539 = vmor %vm537, %vm538
      %v540 = vsel %vm539, %v532, %v536
      %v541 = vand.u32 2147483647, %v531
      %vm542 = vcmp.eq.f32.partialorder %v541, 8.507059e+37
      %v543 = vand.u32 %v531, 2147483648
      %v544 = vor.u32 1.1754944e-38, %v543
      %v545 = vsel %vm542, %v544, %v540
      %v546 = vmul.f32 %v521, %v545
      %v547 = vmin.f32 %v546, 1.0
      %v548 = vmax.f32 %v547, -1.0
      %v549 = vmul.f32 %v385, %v385
      %v550 = vmin.f32 16.0, %v549
      %v551 = vmul.f32 %v550, 2.1237322e-06
      %v552 = vadd.f32 %v551, 0.00028619796
      %v553 = vmul.f32 %v550, %v552
      %v554 = vadd.f32 %v553, 0.0036580483
      %v555 = vmul.f32 %v550, %v554
      %v556 = vadd.f32 %v555, 0.05243302
      %v557 = vmul.f32 %v550, %v556
      %v558 = vadd.f32 %v557, 0.18741608
      %v559 = vmul.f32 %v550, %v558
      %v560 = vadd.f32 %v559, 1.1283791
      %v561 = vmul.f32 %v385, %v560
      %v562 = vmul.f32 %v550, 3.8918573e-05
      %v563 = vadd.f32 %v562, 0.001143296
      %v564 = vmul.f32 %v550, %v563
      %v565 = vadd.f32 %v564, 0.014752088
      %v566 = vmul.f32 %v550, %v565
      %v567 = vadd.f32 %v566, 0.112945676
      %v568 = vmul.f32 %v550, %v567
      %v569 = vadd.f32 %v568, 0.4994258
      %v570 = vmul.f32 %v550, %v569
      %v571 = vadd.f32 %v570, 1.0
      %v572 = vrcp.pop %v571
      %v573 = vmul.f32 %v571, %v572
      %v574 = vsub.f32 1.0, %v573
      %v575 = vmul.f32 %v572, %v574
      %v576 = vadd.f32 %v572, %v575
      %vm577 = vweird.f32 %v571
      %vm578 = vweird.f32 %v572
      %vm579 = vmor %vm577, %vm578
      %v580 = vsel %vm579, %v572, %v576
      %v581 = vand.u32 2147483647, %v571
      %vm582 = vcmp.eq.f32.partialorder %v581, 8.507059e+37
      %v583 = vand.u32 %v571, 2147483648
      %v584 = vor.u32 1.1754944e-38, %v583
      %v585 = vsel %vm582, %v584, %v580
      %v586 = vmul.f32 %v561, %v585
      %v587 = vmin.f32 %v586, 1.0
      %v588 = vmax.f32 %v587, -1.0
      %v589 = vmul.f32 %v386, %v386
      %v590 = vmin.f32 16.0, %v589
      %v591 = vmul.f32 %v590, 2.1237322e-06
      %v592 = vadd.f32 %v591, 0.00028619796
      %v593 = vmul.f32 %v590, %v592
      %v594 = vadd.f32 %v593, 0.0036580483
      %v595 = vmul.f32 %v590, %v594
      %v596 = vadd.f32 %v595, 0.05243302
      %v597 = vmul.f32 %v590, %v596
      %v598 = vadd.f32 %v597, 0.18741608
      %v599 = vmul.f32 %v590, %v598
      %v600 = vadd.f32 %v599, 1.1283791
      %v601 = vmul.f32 %v386, %v600
      %v602 = vmul.f32 %v590, 3.8918573e-05
      %v603 = vadd.f32 %v602, 0.001143296
      %v604 = vmul.f32 %v590, %v603
      %v605 = vadd.f32 %v604, 0.014752088
      %v606 = vmul.f32 %v590, %v605
      %v607 = vadd.f32 %v606, 0.112945676
      %v608 = vmul.f32 %v590, %v607
      %v609 = vadd.f32 %v608, 0.4994258
      %v610 = vmul.f32 %v590, %v609
      %v611 = vadd.f32 %v610, 1.0
      %v612 = vrcp.pop %v611
      %v613 = vmul.f32 %v611, %v612
      %v614 = vsub.f32 1.0, %v613
      %v615 = vmul.f32 %v612, %v614
      %v616 = vadd.f32 %v612, %v615
      %vm617 = vweird.f32 %v611
      %vm618 = vweird.f32 %v612
      %vm619 = vmor %vm617, %vm618
      %v620 = vsel %vm619, %v612, %v616
      %v621 = vand.u32 2147483647, %v611
      %vm622 = vcmp.eq.f32.partialorder %v621, 8.507059e+37
      %v623 = vand.u32 %v611, 2147483648
      %v624 = vor.u32 1.1754944e-38, %v623
      %v625 = vsel %vm622, %v624, %v620
      %v626 = vmul.f32 %v601, %v625
      %v627 = vmin.f32 %v626, 1.0
      %v628 = vmax.f32 %v627, -1.0
      %v629 = vmul.f32 %v387, %v387
      %v630 = vmin.f32 16.0, %v629
      %v631 = vmul.f32 %v630, 2.1237322e-06
      %v632 = vadd.f32 %v631, 0.00028619796
      %v633 = vmul.f32 %v630, %v632
      %v634 = vadd.f32 %v633, 0.0036580483
      %v635 = vmul.f32 %v630, %v634
      %v636 = vadd.f32 %v635, 0.05243302
      %v637 = vmul.f32 %v630, %v636
      %v638 = vadd.f32 %v637, 0.18741608
      %v639 = vmul.f32 %v630, %v638
      %v640 = vadd.f32 %v639, 1.1283791
      %v641 = vmul.f32 %v387, %v640
      %v642 = vmul.f32 %v630, 3.8918573e-05
      %v643 = vadd.f32 %v642, 0.001143296
      %v644 = vmul.f32 %v630, %v643
      %v645 = vadd.f32 %v644, 0.014752088
      %v646 = vmul.f32 %v630, %v645
      %v647 = vadd.f32 %v646, 0.112945676
      %v648 = vmul.f32 %v630, %v647
      %v649 = vadd.f32 %v648, 0.4994258
      %v650 = vmul.f32 %v630, %v649
      %v651 = vadd.f32 %v650, 1.0
      %v652 = vrcp.pop %v651
      %v653 = vmul.f32 %v651, %v652
      %v654 = vsub.f32 1.0, %v653
      %v655 = vmul.f32 %v652, %v654
      %v656 = vadd.f32 %v652, %v655
      %vm657 = vweird.f32 %v651
      %vm658 = vweird.f32 %v652
      %vm659 = vmor %vm657, %vm658
      %v660 = vsel %vm659, %v652, %v656
      %v661 = vand.u32 2147483647, %v651
      %vm662 = vcmp.eq.f32.partialorder %v661, 8.507059e+37
      %v663 = vand.u32 %v651, 2147483648
      %v664 = vor.u32 1.1754944e-38, %v663
      %v665 = vsel %vm662, %v664, %v660
      %v666 = vmul.f32 %v641, %v665
      %v667 = vmin.f32 %v666, 1.0
      %v668 = vmax.f32 %v667, -1.0
      %v669 = vmul.f32 %v388, %v388
      %v670 = vmin.f32 16.0, %v669
      %v671 = vmul.f32 %v670, 2.1237322e-06
      %v672 = vadd.f32 %v671, 0.00028619796
      %v673 = vmul.f32 %v670, %v672
      %v674 = vadd.f32 %v673, 0.0036580483
      %v675 = vmul.f32 %v670, %v674
      %v676 = vadd.f32 %v675, 0.05243302
      %v677 = vmul.f32 %v670, %v676
      %v678 = vadd.f32 %v677, 0.18741608
      %v679 = vmul.f32 %v670, %v678
      %v680 = vadd.f32 %v679, 1.1283791
      %v681 = vmul.f32 %v388, %v680
      %v682 = vmul.f32 %v670, 3.8918573e-05
      %v683 = vadd.f32 %v682, 0.001143296
      %v684 = vmul.f32 %v670, %v683
      %v685 = vadd.f32 %v684, 0.014752088
      %v686 = vmul.f32 %v670, %v685
      %v687 = vadd.f32 %v686, 0.112945676
      %v688 = vmul.f32 %v670, %v687
      %v689 = vadd.f32 %v688, 0.4994258
      %v690 = vmul.f32 %v670, %v689
      %v691 = vadd.f32 %v690, 1.0
      %v692 = vrcp.pop %v691
      %v693 = vmul.f32 %v691, %v692
      %v694 = vsub.f32 1.0, %v693
      %v695 = vmul.f32 %v692, %v694
      %v696 = vadd.f32 %v692, %v695
      %vm697 = vweird.f32 %v691
      %vm698 = vweird.f32 %v692
      %vm699 = vmor %vm697, %vm698
      %v700 = vsel %vm699, %v692, %v696
      %v701 = vand.u32 2147483647, %v691
      %vm702 = vcmp.eq.f32.partialorder %v701, 8.507059e+37
      %v703 = vand.u32 %v691, 2147483648
      %v704 = vor.u32 1.1754944e-38, %v703
      %v705 = vsel %vm702, %v704, %v700
      %v706 = vmul.f32 %v681, %v705
      %v707 = vmin.f32 %v706, 1.0
      %v708 = vmax.f32 %v707, -1.0
      %v709 = vadd.f32 %v428, 1.0
      %v710 = vadd.f32 %v468, 1.0
      %v711 = vadd.f32 %v508, 1.0
      %v712 = vadd.f32 %v548, 1.0
      %v713 = vadd.f32 %v588, 1.0
      %v714 = vadd.f32 %v628, 1.0
      %v715 = vadd.f32 %v668, 1.0
      %v716 = vadd.f32 %v708, 1.0
      %v717 = vmul.f32 %v373, %v709
      %v718 = vmul.f32 %v374, %v710
      %v719 = vmul.f32 %v375, %v711
      %v720 = vmul.f32 %v376, %v712
      %v721 = vmul.f32 %v377, %v713
      %v722 = vmul.f32 %v378, %v714
      %v723 = vmul.f32 %v379, %v715
      %v724 = vmul.f32 %v380, %v716
      %v725 = vld [vmem:[%s3] sm:$0xf]
      %v726 = vld [vmem:[%s4] sm:$0xf]
      %728 = vset.pattern.permute.xlu0 0
      %729 = vperm.xlu0 %728, %v726
      %v730 = vpop.permute.xlu0 %729
      %vm732 = vcmask 261120
      %v734 = vsel %vm732, %v725, 0
      %736 = vmatpush.msra.mxu0 0.0
      %737 = vmatpush.msra.mxu0 0.0
      %738 = vmatpush.msra.mxu0 0.0
      %739 = vmatpush.msra.mxu0 0.0
      %740 = vmatpush.msra.mxu0 0.0
      %741 = vmatpush.msra.mxu0 0.0
      %742 = vmatpush.msra.mxu0 0.0
      %743 = vmatpush.msra.mxu0 0.0
      %744 = vmatpush.msra.mxu0 0.0
      %745 = vmatpush.msra.mxu0 0.0
      %746 = vmatpush.msra.mxu0 0.0
      %747 = vmatpush.msra.mxu0 0.0
      %748 = vmatpush.msra.mxu0 %v723
      %749 = vmatpush.msra.mxu0 %v721
      %750 = vmatpush.msra.mxu0 %v719
      %751 = vmatpush.msra.mxu0 %v717
      %752 = vmatmul.f32.gmra.mxu0 %v734
      %v753 = vpop.f32.mrf.mxu0
      %v754 = vadd.f32 %v730, %v753
      %755 = vdwg.mxu0
      %756 = vmatpush.msra.mxu0 0.0
      %757 = vmatpush.msra.mxu0 0.0
      %758 = vmatpush.msra.mxu0 0.0
      %759 = vmatpush.msra.mxu0 0.0
      %760 = vmatpush.msra.mxu0 0.0
      %761 = vmatpush.msra.mxu0 0.0
      %762 = vmatpush.msra.mxu0 0.0
      %763 = vmatpush.msra.mxu0 0.0
      %764 = vmatpush.msra.mxu0 0.0
      %765 = vmatpush.msra.mxu0 0.0
      %766 = vmatpush.msra.mxu0 0.0
      %767 = vmatpush.msra.mxu0 0.0
      %768 = vmatpush.msra.mxu0 %v724
      %769 = vmatpush.msra.mxu0 %v722
      %770 = vmatpush.msra.mxu0 %v720
      %771 = vmatpush.msra.mxu0 %v718
      %772 = vmatmul.f32.gmra.mxu0 %v734
      %v773 = vpop.f32.mrf.mxu0
      %v774 = vadd.f32 %v730, %v773
      %775 = vdwg.mxu0
      %v778 = vrot.slane %v774, 4
      %v779 = vsel %vm310, %v754, %v778
      %781 = vst [vmem:[%s262] sm:$0xff] %v779
      %s782 = smul.u32 2, %s21
      %p783 = scmp.lt.s32.totalorder %s20, 1
      %s784 = scalar_select %p783, %s20, 1
      %p785 = scmp.lt.s32.totalorder %s782, 1
      %s786 = scalar_select %p785, %s782, 1
      %s787 = smul.addr %s784, 2
      %s788 = sadd.s32 %s786, %s787
      %s789 = smul.addr %s788, 4
      %s790 = scalar_lea.vmem %s5, %s789
      // Predicated region
      $region41: #{mlp_forward.1} parent=39 // pred_check
        %p791 = pneg %p160
      $region42: #{mlp_forward.1} parent=39 // pred_check_branch
        %793 = sbr.rel (%p791) target = $region44
      $region43: #{mlp_forward.1} parent=39 // pred_region
        %s794 = smul.u32 2, %s21
      $region44: #{mlp_forward.1} parent=39 // pred_fallthru
        _
    $region40: #{mlp_forward.1} parent=5 // pred_fallthru
      _
    %p795 = scmp.le.s32.totalorder 2, %s11
    // Predicated region
    $region45: #{mlp_forward.1} parent=5 // pred_check
      %p796 = pneg %p795
    $region46: #{mlp_forward.1} parent=5 // pred_check_branch
      %798 = sbr.rel (%p796) target = $region48
    $region47: #{mlp_forward.1} parent=5 // pred_region
      %s799 = ssub.s32 %s11, 2
      // Predicated region
      $region49: #{mlp_forward.1} parent=47 // pred_check
        %p800 = pneg %p166
      $region50: #{mlp_forward.1} parent=47 // pred_check_branch
        %802 = sbr.rel (%p800) target = $region52
      $region51: #{mlp_forward.1} parent=47 // pred_region
        %s803 = smul.u32 2, %s23
        %p804 = scmp.lt.s32.totalorder %s22, 1
        %s805 = scalar_select %p804, %s22, 1
        %p806 = scmp.lt.s32.totalorder %s803, 1
        %s807 = scalar_select %p806, %s803, 1
        %s808 = smul.addr %s805, 2
        %s809 = sadd.s32 %s807, %s808
        %s810 = smul.addr %s809, 4
        %s811 = scalar_lea.vmem %s5, %s810
      $region52: #{mlp_forward.1} parent=47 // pred_fallthru
        _
    $region48: #{mlp_forward.1} parent=5 // pred_fallthru
      _
  $region6: #{mlp_forward.1} parent=0 // loop_footer
    %s15 = sadd.s32 1, %s11
  $region7: #{mlp_forward.1} parent=0 // loop_footer_branch
    %10 = sbr.rel target = $region3
  $region8: #{mlp_forward.1} parent=0 // loop_exit
    _

</llo_original>
